<compile_context>
chip_gen: v5e
topology: v5e:2x2
jax: 0.10.0
libtpu: 0.0.40
codegen_flags: <defaults>
</compile_context>

<pallas_src>
import functools

import jax
import jax.numpy as jnp
from jax.experimental import pallas as pl
from jax.experimental.pallas import tpu as pltpu


# ----------------------------------------------------------------------------
# Sampling / grouping glue (plain JAX; data-dependent gathers, not kernel work)
# ----------------------------------------------------------------------------
def farthest_point_sample(xyz, npoint):
    """xyz: [B, N, 3] -> indices [B, npoint]."""
    B, N, _ = xyz.shape
    # TODO(synk): torch version seeds FPS with torch.randint; use index 0 for determinism.
    farthest = jnp.zeros((B,), dtype=jnp.int32)
    distance = jnp.full((B, N), 1e10, dtype=jnp.float32)
    batch_idx = jnp.arange(B)
    centroids = []
    for _ in range(npoint):
        centroids.append(farthest)
        centroid = xyz[batch_idx, farthest][:, None, :]          # [B, 1, 3]
        dist = jnp.sum((xyz - centroid) ** 2, axis=-1)           # [B, N]
        distance = jnp.minimum(distance, dist)
        farthest = jnp.argmax(distance, axis=-1).astype(jnp.int32)
    return jnp.stack(centroids, axis=1)                          # [B, npoint]


def index_points(points, idx):
    """points [B, N, C], idx [B, ...] -> [B, ..., C]."""
    B = points.shape[0]
    batch = jnp.arange(B).reshape((B,) + (1,) * (idx.ndim - 1))
    return points[batch, idx]


def square_distance(src, dst):
    d = -2.0 * jnp.einsum("bnc,bsc->bns", src, dst)
    d = d + jnp.sum(src**2, axis=-1)[..., None]
    d = d + jnp.sum(dst**2, axis=-1)[:, None, :]
    return d


def query_ball_point(radius, nsample, xyz, new_xyz):
    B, N, _ = xyz.shape
    S = new_xyz.shape[1]
    group_idx = jnp.broadcast_to(jnp.arange(N, dtype=jnp.int32), (B, S, N))
    sqrdists = square_distance(new_xyz, xyz)
    group_idx = jnp.where(sqrdists > radius**2, N, group_idx)
    group_idx = jnp.sort(group_idx, axis=-1)[:, :, :nsample]
    group_first = jnp.broadcast_to(group_idx[:, :, :1], group_idx.shape)
    group_idx = jnp.where(group_idx == N, group_first, group_idx)
    return group_idx


def sample_and_group(npoint, radius, nsample, xyz, points):
    """xyz [B, N, 3], points [B, N, D] or None."""
    new_idx = farthest_point_sample(xyz, npoint)                 # [B, S]
    new_xyz = index_points(xyz, new_idx)                         # [B, S, 3]
    idx = query_ball_point(radius, nsample, xyz, new_xyz)        # [B, S, K]
    grouped_xyz = index_points(xyz, idx)                         # [B, S, K, 3]
    grouped_xyz_norm = grouped_xyz - new_xyz[:, :, None, :]
    if points is not None:
        grouped_points = index_points(points, idx)               # [B, S, K, D]
        new_points = jnp.concatenate([grouped_xyz_norm, grouped_points], axis=-1)
    else:
        new_points = grouped_xyz_norm
    return new_xyz, new_points                                   # [B,S,3], [B,S,K,3+D]


def sample_and_group_all(xyz, points):
    B, N, C = xyz.shape
    new_xyz = jnp.zeros((B, 1, C), dtype=xyz.dtype)
    grouped_xyz = xyz.reshape(B, 1, N, C)
    if points is not None:
        new_points = jnp.concatenate(
            [grouped_xyz, points.reshape(B, 1, N, -1)], axis=-1
        )
    else:
        new_points = grouped_xyz
    return new_xyz, new_points


# ----------------------------------------------------------------------------
# Pallas kernel: stacked (1x1 conv + BN + ReLU) MLP + max-pool over nsample
# ----------------------------------------------------------------------------
def _round_up(x, m):
    return ((x + m - 1) // m) * m


def _mlp_maxpool_kernel(nlayers, ts, tk, x_ref, *refs):
    """refs = (w1, b1, ..., wL, bL, o_ref, acc_ref).

    x_ref block: [TS, TK, C0] bf16.  o_ref block: [TS, c_pad] f32.
    acc_ref: VMEM [TS, c_pad] f32 running max over the K grid axis.
    """
    o_ref = refs[2 * nlayers]
    acc_ref = refs[2 * nlayers + 1]
    k = pl.program_id(1)

    @pl.when(k == 0)
    def _init():
        acc_ref[...] = jnp.full_like(acc_ref, -jnp.inf)

    c0 = x_ref.shape[-1]
    h = x_ref[...].reshape(ts * tk, c0)                          # bf16 rows
    for layer in range(nlayers):
        w = refs[2 * layer][...]                                 # bf16 [Cin, Cout]
        b = refs[2 * layer + 1][...]                             # f32  [1, Cout]
        z = jnp.dot(h, w, preferred_element_type=jnp.float32) + b
        z = jnp.maximum(z, 0.0)                                  # ReLU in f32
        if layer + 1 < nlayers:
            h = z.astype(jnp.bfloat16)                           # bf16 for next MXU pass
        else:
            h = z                                                # keep f32 for the max
    c_pad = h.shape[-1]
    partial_max = jnp.max(h.reshape(ts, tk, c_pad), axis=1)      # max over this K tile
    acc_ref[...] = jnp.maximum(acc_ref[...], partial_max)

    @pl.when(k == pl.num_programs(1) - 1)
    def _store():
        o_ref[...] = acc_ref[...]


def mlp_maxpool(grouped, weights, biases):
    """grouped [B, S, K, C0] -> [B, S, c_last] float32.

    weights[i]: [Cin_i, Cout_i] (folded conv+BN), biases[i]: [1, Cout_i].
    """
    B, S, K, C0 = grouped.shape
    nlayers = len(weights)
    c_last = weights[-1].shape[-1]
    c_pad = max(128, _round_up(c_last, 128))                     # lane-dense output stores

    # bf16 weights (halves HBM/VMEM traffic; MXU-native), f32 biases.
    w_list = [w.astype(jnp.bfloat16) for w in weights]
    b_list = [b.astype(jnp.float32).reshape(1, -1) for b in biases]
    if c_pad != c_last:
        w_list[-1] = jnp.pad(w_list[-1], ((0, 0), (0, c_pad - c_last)))
        b_list[-1] = jnp.pad(b_list[-1], ((0, 0), (0, c_pad - c_last)))
    max_cout = max(w.shape[-1] for w in w_list)

    # ---- tile sizing: keep the widest per-tile f32 activation ~<= 8 MiB ----
    G = B * S
    K8 = _round_up(K, 8)                                         # sublane-aligned K
    rows_budget = (8 << 20) // (4 * max_cout)
    rows_budget = int(max(512, min(rows_budget, 4096)))
    if K8 * 8 <= rows_budget:
        TK = K8                                                  # whole group per step
        TS = min((rows_budget // TK) // 8 * 8, _round_up(G, 8))
        TS = max(TS, 8)
    else:
        TS = 8                                                   # huge K (group_all): tile K
        TK = max(8, min(K8, (rows_budget // 8) // 8 * 8))
    K_eff = _round_up(K8, TK)
    G_eff = _round_up(G, TS)

    x = grouped.reshape(G, K, C0).astype(jnp.bfloat16)
    if K_eff != K:
        # Replicate each group's first sample: leaves the per-group max unchanged.
        pad = jnp.broadcast_to(x[:, :1, :], (G, K_eff - K, C0))
        x = jnp.concatenate([x, pad], axis=1)
    if G_eff != G:
        x = jnp.concatenate(
            [x, jnp.zeros((G_eff - G, K_eff, C0), x.dtype)], axis=0
        )

    grid = (G_eff // TS, K_eff // TK)

    in_specs = [pl.BlockSpec((TS, TK, C0), lambda g, k: (g, k, 0))]
    params = []
    for w, b in zip(w_list, b_list):
        in_specs.append(pl.BlockSpec(w.shape, lambda g, k: (0, 0)))  # resident
        in_specs.append(pl.BlockSpec(b.shape, lambda g, k: (0, 0)))  # resident
        params += [w, b]

    kernel = functools.partial(_mlp_maxpool_kernel, nlayers, TS, TK)

    out = pl.pallas_call(
        kernel,
        out_shape=jax.ShapeDtypeStruct((G_eff, c_pad), jnp.float32),
        grid=grid,
        in_specs=in_specs,
        out_specs=pl.BlockSpec((TS, c_pad), lambda g, k: (g, 0)),
        scratch_shapes=[pltpu.VMEM((TS, c_pad), jnp.float32)],
        compiler_params=pltpu.CompilerParams(
            dimension_semantics=("parallel", "arbitrary"),
        ),
    )(x, *params)

    return out[:G, :c_last].reshape(B, S, c_last)


# ----------------------------------------------------------------------------
# Module wrapper
# ----------------------------------------------------------------------------
class PointNetSetAbstraction:
    def __init__(self, npoint, radius, nsample, in_channel, mlp, group_all, key):
        self.npoint = npoint
        self.radius = radius
        self.nsample = nsample
        self.in_channel = in_channel
        self.group_all = group_all

        eps = 1e-5
        last_channel = in_channel + 3
        self.weights = []   # folded conv+BN weights, shape [Cin, Cout] (f32)
        self.biases = []    # folded biases, shape [1, Cout] (f32)
        for out_channel in mlp:
            key, k1, k2 = jax.random.split(key, 3)
            bound = 1.0 / jnp.sqrt(last_channel)
            w = jax.random.uniform(
                k1, (out_channel, last_channel), jnp.float32, -bound, bound
            )
            b = jax.random.uniform(k2, (out_channel,), jnp.float32, -bound, bound)
            # BN folded in inference form with fresh/identity running stats
            # (gamma=1, beta=0, mean=0, var=1).  Loading trained stats would
            # require scale = gamma/sqrt(var+eps), shift = beta - mean*scale.
            scale = 1.0 / jnp.sqrt(1.0 + eps)
            self.weights.append((w * scale).T)                   # [Cin, Cout]
            self.biases.append((b * scale).reshape(1, out_channel))
            last_channel = out_channel

    def forward(self, xyz, points):
        """xyz [B, 3, N], points [B, D, N] or None ->
        (new_xyz [B, 3, S], new_points [B, mlp[-1], S])."""
        xyz_t = jnp.transpose(xyz, (0, 2, 1))                    # [B, N, 3]
        points_t = None
        if points is not None:
            assert points.shape[1] == self.in_channel
            points_t = jnp.transpose(points, (0, 2, 1))          # [B, N, D]

        if self.group_all:
            new_xyz, new_points = sample_and_group_all(xyz_t, points_t)
        else:
            new_xyz, new_points = sample_and_group(
                self.npoint, self.radius, self.nsample, xyz_t, points_t
            )

        feat = mlp_maxpool(new_points, self.weights, self.biases)  # [B, S, C']

        new_xyz_out = jnp.transpose(new_xyz, (0, 2, 1))          # [B, 3, S]
        new_points_out = jnp.transpose(feat, (0, 2, 1))          # [B, C', S]
        return new_xyz_out, new_points_out


# ----------------------------------------------------------------------------
# Pure-JAX reference for the kernel part (same bf16-matmul / f32-accumulate path)
# ----------------------------------------------------------------------------
def _mlp_maxpool_ref(grouped, weights, biases):
    """grouped [B, S, K, C0] -> [B, S, c_last]."""
    L = len(weights)
    h = grouped.astype(jnp.bfloat16)
    for i, (w, b) in enumerate(zip(weights, biases)):
        z = jnp.einsum(
            "bskc,cd->bskd", h, w.astype(jnp.bfloat16),
            preferred_element_type=jnp.float32,
        )
        z = jnp.maximum(z + b.reshape(1, 1, 1, -1), 0.0)
        h = z.astype(jnp.bfloat16) if i + 1 < L else z
    return jnp.max(h, axis=2)                                    # max over nsample


if __name__ == "__main__":
    key = jax.random.PRNGKey(0)
    B, N, D = 2, 32, 4          # batch, points, input feature channels
    npoint, nsample = 16, 8
    radius = 0.4
    mlp = [32, 32, 64]

    k_xyz, k_pts, k_params, k_params2 = jax.random.split(key, 4)
    xyz = jax.random.uniform(k_xyz, (B, 3, N), jnp.float32)      # [B, 3, N]
    points = jax.random.normal(k_pts, (B, D, N), jnp.float32)    # [B, D, N]

    # ---- standard (grouped) SA layer ----
    sa = PointNetSetAbstraction(
        npoint=npoint, radius=radius, nsample=nsample,
        in_channel=D, mlp=mlp, group_all=False, key=k_params,
    )
    new_xyz, new_points = sa.forward(xyz, points)
    jax.block_until_ready((new_xyz, new_points))
    assert new_xyz.shape == (B, 3, npoint)
    assert new_points.shape == (B, mlp[-1], npoint)

    xyz_t = jnp.transpose(xyz, (0, 2, 1))
    pts_t = jnp.transpose(points, (0, 2, 1))
    _, grouped = sample_and_group(npoint, radius, nsample, xyz_t, pts_t)
    ref = _mlp_maxpool_ref(grouped, sa.weights, sa.biases)
    got = jnp.transpose(new_points, (0, 2, 1))
    assert jnp.allclose(got, ref, atol=1e-2, rtol=1e-2)

    # ---- group_all SA layer (exercises the K-tiling / small-G path) ----
    sa_all = PointNetSetAbstraction(
        npoint=None, radius=None, nsample=None,
        in_channel=D, mlp=[32, 64], group_all=True, key=k_params2,
    )
    gxyz, gfeat = sa_all.forward(xyz, points)
    jax.block_until_ready((gxyz, gfeat))
    assert gxyz.shape == (B, 3, 1)
    assert gfeat.shape == (B, 64, 1)
    _, grouped_all = sample_and_group_all(xyz_t, pts_t)
    ref_all = _mlp_maxpool_ref(grouped_all, sa_all.weights, sa_all.biases)
    got_all = jnp.transpose(gfeat, (0, 2, 1))
    assert jnp.allclose(got_all, ref_all, atol=1e-2, rtol=1e-2)

    print("KERNEL_OK")
</pallas_src>

<mosaic_0001>
module attributes {stable_mosaic.version = 11 : i64} {
  func.func @_mlp_maxpool_kernel(%arg0: i32, %arg1: i32, %arg2: memref<32x8x7xbf16, #tpu.memory_space<vmem>>, %arg3: memref<7x32xbf16, #tpu.memory_space<vmem>>, %arg4: memref<1x32xf32, #tpu.memory_space<vmem>>, %arg5: memref<32x32xbf16, #tpu.memory_space<vmem>>, %arg6: memref<1x32xf32, #tpu.memory_space<vmem>>, %arg7: memref<32x128xbf16, #tpu.memory_space<vmem>>, %arg8: memref<1x128xf32, #tpu.memory_space<vmem>>, %arg9: memref<32x128xf32, #tpu.memory_space<vmem>>, %arg10: memref<32x128xf32, #tpu.memory_space<vmem>>) attributes {dimension_semantics = [#tpu.dimension_semantics<parallel>, #tpu.dimension_semantics<arbitrary>], iteration_bounds = array<i64: 1, 1>, scalar_prefetch = 0 : i64, scratch_operands = 1 : i64, tpu.core_type = #tpu.core_type<tc>, window_params = [{transform_indices = @transform_0, window_bounds = array<i64: 32, 8, 7>}, {pipeline_mode = #tpu.pipeline_mode<synchronous>, transform_indices = @transform_1, window_bounds = array<i64: 7, 32>}, {pipeline_mode = #tpu.pipeline_mode<synchronous>, transform_indices = @transform_2, window_bounds = array<i64: 1, 32>}, {pipeline_mode = #tpu.pipeline_mode<synchronous>, transform_indices = @transform_3, window_bounds = array<i64: 32, 32>}, {pipeline_mode = #tpu.pipeline_mode<synchronous>, transform_indices = @transform_4, window_bounds = array<i64: 1, 32>}, {pipeline_mode = #tpu.pipeline_mode<synchronous>, transform_indices = @transform_5, window_bounds = array<i64: 32, 128>}, {pipeline_mode = #tpu.pipeline_mode<synchronous>, transform_indices = @transform_6, window_bounds = array<i64: 1, 128>}, {transform_indices = @transform_7, window_bounds = array<i64: 32, 128>}]} {
    %c0_i32 = arith.constant 0 : i32
    %0 = arith.cmpi eq, %arg1, %c0_i32 : i32
    %1 = arith.extui %0 : i1 to i32
    %c0_i32_0 = arith.constant 0 : i32
    %2 = arith.cmpi ne, %1, %c0_i32_0 : i32
    scf.if %2 {
      %cst_27 = arith.constant 0xFF800000 : f32
      %36 = vector.broadcast %cst_27 : f32 to vector<32x128xf32>
      %c0_28 = arith.constant 0 : index
      %c0_29 = arith.constant 0 : index
      %37 = vector.load %arg10[%c0_28, %c0_29] : memref<32x128xf32, #tpu.memory_space<vmem>>, vector<32x128xf32>
      tpu.vector_store %arg10[%c0_28, %c0_29], %36 {strides = array<i32>} : memref<32x128xf32, #tpu.memory_space<vmem>>, vector<32x128xf32>,
    } else {
    }
    %c0 = arith.constant 0 : index
    %c0_1 = arith.constant 0 : index
    %c0_2 = arith.constant 0 : index
    %3 = vector.load %arg2[%c0, %c0_1, %c0_2] : memref<32x8x7xbf16, #tpu.memory_space<vmem>>, vector<32x8x7xbf16>
    %4 = vector.shape_cast %3 : vector<32x8x7xbf16> to vector<256x7xbf16>
    %c0_3 = arith.constant 0 : index
    %c0_4 = arith.constant 0 : index
    %5 = vector.load %arg3[%c0_3, %c0_4] : memref<7x32xbf16, #tpu.memory_space<vmem>>, vector<7x32xbf16>
    %c0_5 = arith.constant 0 : index
    %c0_6 = arith.constant 0 : index
    %6 = vector.load %arg4[%c0_5, %c0_6] : memref<1x32xf32, #tpu.memory_space<vmem>>, vector<1x32xf32>
    %cst = arith.constant dense<0.000000e+00> : vector<256x32xf32>
    %7 = tpu.matmul %4, %5, %cst {dimension_numbers = #tpu.dot_dimension_numbers<[1], [0], [0], [1], [0, 0, 1, 1], [], []>} : vector<256x7xbf16>, vector<7x32xbf16>, vector<256x32xf32> -> vector<256x32xf32>
    %8 = vector.broadcast %6 : vector<1x32xf32> to vector<256x32xf32>
    %9 = arith.addf %7, %8 : vector<256x32xf32>
    %cst_7 = arith.constant 0.000000e+00 : f32
    %10 = vector.broadcast %cst_7 : f32 to vector<256x32xf32>
    %11 = arith.maximumf %9, %10 : vector<256x32xf32>
    %12 = arith.truncf %11 : vector<256x32xf32> to vector<256x32xbf16>
    %c0_8 = arith.constant 0 : index
    %c0_9 = arith.constant 0 : index
    %13 = vector.load %arg5[%c0_8, %c0_9] : memref<32x32xbf16, #tpu.memory_space<vmem>>, vector<32x32xbf16>
    %c0_10 = arith.constant 0 : index
    %c0_11 = arith.constant 0 : index
    %14 = vector.load %arg6[%c0_10, %c0_11] : memref<1x32xf32, #tpu.memory_space<vmem>>, vector<1x32xf32>
    %cst_12 = arith.constant dense<0.000000e+00> : vector<256x32xf32>
    %15 = tpu.matmul %12, %13, %cst_12 {dimension_numbers = #tpu.dot_dimension_numbers<[1], [0], [0], [1], [0, 0, 1, 1], [], []>} : vector<256x32xbf16>, vector<32x32xbf16>, vector<256x32xf32> -> vector<256x32xf32>
    %16 = vector.broadcast %14 : vector<1x32xf32> to vector<256x32xf32>
    %17 = arith.addf %15, %16 : vector<256x32xf32>
    %cst_13 = arith.constant 0.000000e+00 : f32
    %18 = vector.broadcast %cst_13 : f32 to vector<256x32xf32>
    %19 = arith.maximumf %17, %18 : vector<256x32xf32>
    %20 = arith.truncf %19 : vector<256x32xf32> to vector<256x32xbf16>
    %c0_14 = arith.constant 0 : index
    %c0_15 = arith.constant 0 : index
    %21 = vector.load %arg7[%c0_14, %c0_15] : memref<32x128xbf16, #tpu.memory_space<vmem>>, vector<32x128xbf16>
    %c0_16 = arith.constant 0 : index
    %c0_17 = arith.constant 0 : index
    %22 = vector.load %arg8[%c0_16, %c0_17] : memref<1x128xf32, #tpu.memory_space<vmem>>, vector<1x128xf32>
    %cst_18 = arith.constant dense<0.000000e+00> : vector<256x128xf32>
    %23 = tpu.matmul %20, %21, %cst_18 {dimension_numbers = #tpu.dot_dimension_numbers<[1], [0], [0], [1], [0, 0, 1, 1], [], []>} : vector<256x32xbf16>, vector<32x128xbf16>, vector<256x128xf32> -> vector<256x128xf32>
    %24 = vector.broadcast %22 : vector<1x128xf32> to vector<256x128xf32>
    %25 = arith.addf %23, %24 : vector<256x128xf32>
    %cst_19 = arith.constant 0.000000e+00 : f32
    %26 = vector.broadcast %cst_19 : f32 to vector<256x128xf32>
    %27 = arith.maximumf %25, %26 : vector<256x128xf32>
    %28 = vector.shape_cast %27 : vector<256x128xf32> to vector<32x8x128xf32>
    %cst_20 = arith.constant dense<0xFF800000> : vector<32x128xf32>
    %29 = vector.multi_reduction <maximumf>, %28, %cst_20 [1] : vector<32x8x128xf32> to vector<32x128xf32>
    %c0_21 = arith.constant 0 : index
    %c0_22 = arith.constant 0 : index
    %30 = vector.load %arg10[%c0_21, %c0_22] : memref<32x128xf32, #tpu.memory_space<vmem>>, vector<32x128xf32>
    %31 = arith.maximumf %30, %29 : vector<32x128xf32>
    %c0_23 = arith.constant 0 : index
    %c0_24 = arith.constant 0 : index
    %32 = vector.load %arg10[%c0_23, %c0_24] : memref<32x128xf32, #tpu.memory_space<vmem>>, vector<32x128xf32>
    tpu.vector_store %arg10[%c0_23, %c0_24], %31 {strides = array<i32>} : memref<32x128xf32, #tpu.memory_space<vmem>>, vector<32x128xf32>,
    %c0_i32_25 = arith.constant 0 : i32
    %33 = arith.cmpi eq, %arg1, %c0_i32_25 : i32
    %34 = arith.extui %33 : i1 to i32
    %c0_i32_26 = arith.constant 0 : i32
    %35 = arith.cmpi ne, %34, %c0_i32_26 : i32
    scf.if %35 {
      %c0_27 = arith.constant 0 : index
      %c0_28 = arith.constant 0 : index
      %36 = vector.load %arg10[%c0_27, %c0_28] : memref<32x128xf32, #tpu.memory_space<vmem>>, vector<32x128xf32>
      %c0_29 = arith.constant 0 : index
      %c0_30 = arith.constant 0 : index
      %37 = vector.load %arg9[%c0_29, %c0_30] : memref<32x128xf32, #tpu.memory_space<vmem>>, vector<32x128xf32>
      tpu.vector_store %arg9[%c0_29, %c0_30], %36 {strides = array<i32>} : memref<32x128xf32, #tpu.memory_space<vmem>>, vector<32x128xf32>,
    } else {
    }
    return
  }
  func.func @transform_0(%arg0: i32, %arg1: i32) -> (i32, i32, i32) {
    %c0_i32 = arith.constant 0 : i32
    %c0_i32_0 = arith.constant 0 : i32
    return %arg0, %arg1, %c0_i32 : i32, i32, i32
  }
  func.func @transform_1(%arg0: i32, %arg1: i32) -> (i32, i32) {
    %c0_i32 = arith.constant 0 : i32
    %c0_i32_0 = arith.constant 0 : i32
    %c0_i32_1 = arith.constant 0 : i32
    return %c0_i32, %c0_i32_0 : i32, i32
  }
  func.func @transform_2(%arg0: i32, %arg1: i32) -> (i32, i32) {
    %c0_i32 = arith.constant 0 : i32
    %c0_i32_0 = arith.constant 0 : i32
    %c0_i32_1 = arith.constant 0 : i32
    return %c0_i32, %c0_i32_0 : i32, i32
  }
  func.func @transform_3(%arg0: i32, %arg1: i32) -> (i32, i32) {
    %c0_i32 = arith.constant 0 : i32
    %c0_i32_0 = arith.constant 0 : i32
    %c0_i32_1 = arith.constant 0 : i32
    return %c0_i32, %c0_i32_0 : i32, i32
  }
  func.func @transform_4(%arg0: i32, %arg1: i32) -> (i32, i32) {
    %c0_i32 = arith.constant 0 : i32
    %c0_i32_0 = arith.constant 0 : i32
    %c0_i32_1 = arith.constant 0 : i32
    return %c0_i32, %c0_i32_0 : i32, i32
  }
  func.func @transform_5(%arg0: i32, %arg1: i32) -> (i32, i32) {
    %c0_i32 = arith.constant 0 : i32
    %c0_i32_0 = arith.constant 0 : i32
    %c0_i32_1 = arith.constant 0 : i32
    return %c0_i32, %c0_i32_0 : i32, i32
  }
  func.func @transform_6(%arg0: i32, %arg1: i32) -> (i32, i32) {
    %c0_i32 = arith.constant 0 : i32
    %c0_i32_0 = arith.constant 0 : i32
    %c0_i32_1 = arith.constant 0 : i32
    return %c0_i32, %c0_i32_0 : i32, i32
  }
  func.func @transform_7(%arg0: i32, %arg1: i32) -> (i32, i32) {
    %c0_i32 = arith.constant 0 : i32
    %c0_i32_0 = arith.constant 0 : i32
    return %arg0, %c0_i32 : i32, i32
  }
}

</mosaic_0001>

<llo_original>
// kernel: tpu_custom_call.1
$region0: #{tpu_custom_call.1}
  #allocation0 [shape = 'u32[]', space=smem, size = 0x4, offset = 0x4, fixed_abs, tag = 'smem constant byte address 0x4 - core index']
  #allocation1 [shape = 'u32[72,128]{1,0:T(1,128)}', space=vmem, size = 0x9000, scoped, tag = 'internal scratch']
  #allocation2 [shape = 'f32[32,128]{1,0:T(8,128)}', space=vmem, size = 0x4000, scoped, tag = 'scratch operand']
  %s0 = inlined_call_operand.vmem [shape: bf16[32,8,7], index: 0, kind: input, shape index: {}]
  %s1 = inlined_call_operand.vmem [shape: bf16[7,32], index: 1, kind: input, shape index: {}]
  %s2 = inlined_call_operand.vmem [shape: f32[1,32], index: 2, kind: input, shape index: {}]
  %s3 = inlined_call_operand.vmem [shape: bf16[32,32], index: 3, kind: input, shape index: {}]
  %s4 = inlined_call_operand.vmem [shape: f32[1,32], index: 4, kind: input, shape index: {}]
  %s5 = inlined_call_operand.vmem [shape: bf16[32,128], index: 5, kind: input, shape index: {}]
  %s6 = inlined_call_operand.vmem [shape: f32[1,128], index: 6, kind: input, shape index: {}]
  %s7 = inlined_call_operand.hbm [shape: f32[32,128], index: 7, kind: output, shape index: {}]
  %s8 = sld [smem:[#allocation0]]
  $region46: #{tpu_custom_call.1} parent=0
    _
  %s10 = ssub.s32 1, %s8
  %s11 = scalar_select 0, %s10, %s8
  $region1: #{tpu_custom_call.1} parent=0
    #allocation3 [shape = 'u8[16384]{0}', space=vmem, size = 0x4000, scoped, tag = 'output window, operand 0, single buffered']
    #allocation4 [shape = 's32[1]{0}', space=sflag, size = 0x4, scoped, tag = 'scoped memory for tpu_custom_call.1']
    %12 = vsyncpa [#allocation4], 0
    // Predicated region
    $region2: #{tpu_custom_call.1} parent=1 // pred_check
      _
    $region3: #{tpu_custom_call.1} parent=1 // pred_check_branch
      %14 = sbr.rel (0) target = $region5
    $region4: #{tpu_custom_call.1} parent=1 // pred_region
      _
    $region5: #{tpu_custom_call.1} parent=1 // pred_fallthru
      _
    // Predicated region
    $region6: #{tpu_custom_call.1} parent=1 // pred_check
      _
    $region7: #{tpu_custom_call.1} parent=1 // pred_check_branch
      %16 = sbr.rel (0) target = $region9
    $region8: #{tpu_custom_call.1} parent=1 // pred_region
      _
    $region9: #{tpu_custom_call.1} parent=1 // pred_fallthru
      _
    // Predicated region
    $region10: #{tpu_custom_call.1} parent=1 // pred_check
      _
    $region11: #{tpu_custom_call.1} parent=1 // pred_check_branch
      %18 = sbr.rel (0) target = $region13
    $region12: #{tpu_custom_call.1} parent=1 // pred_region
      _
    $region13: #{tpu_custom_call.1} parent=1 // pred_fallthru
      _
    // Predicated region
    $region14: #{tpu_custom_call.1} parent=1 // pred_check
      _
    $region15: #{tpu_custom_call.1} parent=1 // pred_check_branch
      %20 = sbr.rel (0) target = $region17
    $region16: #{tpu_custom_call.1} parent=1 // pred_region
      _
    $region17: #{tpu_custom_call.1} parent=1 // pred_fallthru
      _
    // Predicated region
    $region18: #{tpu_custom_call.1} parent=1 // pred_check
      _
    $region19: #{tpu_custom_call.1} parent=1 // pred_check_branch
      %22 = sbr.rel (0) target = $region21
    $region20: #{tpu_custom_call.1} parent=1 // pred_region
      _
    $region21: #{tpu_custom_call.1} parent=1 // pred_fallthru
      _
    // Predicated region
    $region22: #{tpu_custom_call.1} parent=1 // pred_check
      _
    $region23: #{tpu_custom_call.1} parent=1 // pred_check_branch
      %24 = sbr.rel (0) target = $region25
    $region24: #{tpu_custom_call.1} parent=1 // pred_region
      _
    $region25: #{tpu_custom_call.1} parent=1 // pred_fallthru
      _
    // Predicated region
    $region26: #{tpu_custom_call.1} parent=1 // pred_check
      _
    $region27: #{tpu_custom_call.1} parent=1 // pred_check_branch
      %26 = sbr.rel (0) target = $region29
    $region28: #{tpu_custom_call.1} parent=1 // pred_region
      _
    $region29: #{tpu_custom_call.1} parent=1 // pred_fallthru
      _
    %p28 = scmp.eq.s32.totalorder 0, 0
    // Predicated region
    $region30: #{tpu_custom_call.1} parent=1 // pred_check
      %p29 = pneg %p28
    $region31: #{tpu_custom_call.1} parent=1 // pred_check_branch
      %31 = sbr.rel (%p29) target = $region33
    $region32: #{tpu_custom_call.1} parent=1 // pred_region
      %32 = vst [vmem:[#allocation2] sm:$0xff] -inf
      %33 = vst [vmem:[#allocation2 + $0x8] sm:$0xff] -inf
      %34 = vst [vmem:[#allocation2 + $0x10] sm:$0xff] -inf
      %35 = vst [vmem:[#allocation2 + $0x18] sm:$0xff] -inf
    $region33: #{tpu_custom_call.1} parent=1 // pred_fallthru
      _
    %v36 = vld [vmem:[%s0] sm:$0xf]
    %v37 = vld [vmem:[%s0 + $0x4] sm:$0xf]
    %v38 = vld [vmem:[%s0 + $0x8] sm:$0xf]
    %v39 = vld [vmem:[%s0 + $0xc] sm:$0xf]
    %v40 = vld [vmem:[%s0 + $0x10] sm:$0xf]
    %v41 = vld [vmem:[%s0 + $0x14] sm:$0xf]
    %v42 = vld [vmem:[%s0 + $0x18] sm:$0xf]
    %v43 = vld [vmem:[%s0 + $0x1c] sm:$0xf]
    %v44 = vld [vmem:[%s0 + $0x20] sm:$0xf]
    %v45 = vld [vmem:[%s0 + $0x24] sm:$0xf]
    %v46 = vld [vmem:[%s0 + $0x28] sm:$0xf]
    %v47 = vld [vmem:[%s0 + $0x2c] sm:$0xf]
    %v48 = vld [vmem:[%s0 + $0x30] sm:$0xf]
    %v49 = vld [vmem:[%s0 + $0x34] sm:$0xf]
    %v50 = vld [vmem:[%s0 + $0x38] sm:$0xf]
    %v51 = vld [vmem:[%s0 + $0x3c] sm:$0xf]
    %v52 = vld [vmem:[%s0 + $0x40] sm:$0xf]
    %v53 = vld [vmem:[%s0 + $0x44] sm:$0xf]
    %v54 = vld [vmem:[%s0 + $0x48] sm:$0xf]
    %v55 = vld [vmem:[%s0 + $0x4c] sm:$0xf]
    %v56 = vld [vmem:[%s0 + $0x50] sm:$0xf]
    %v57 = vld [vmem:[%s0 + $0x54] sm:$0xf]
    %v58 = vld [vmem:[%s0 + $0x58] sm:$0xf]
    %v59 = vld [vmem:[%s0 + $0x5c] sm:$0xf]
    %v60 = vld [vmem:[%s0 + $0x60] sm:$0xf]
    %v61 = vld [vmem:[%s0 + $0x64] sm:$0xf]
    %v62 = vld [vmem:[%s0 + $0x68] sm:$0xf]
    %v63 = vld [vmem:[%s0 + $0x6c] sm:$0xf]
    %v64 = vld [vmem:[%s0 + $0x70] sm:$0xf]
    %v65 = vld [vmem:[%s0 + $0x74] sm:$0xf]
    %v66 = vld [vmem:[%s0 + $0x78] sm:$0xf]
    %v67 = vld [vmem:[%s0 + $0x7c] sm:$0xf]
    %v68 = vld [vmem:[%s1] sm:$0xf]
    %v69 = vld [vmem:[%s2] sm:$0x1]
    %v71 = vperm.slane %v69, 0
    %v105 = vunpack.c.l.b16 %v36
    %v106 = vunpack.c.l.b16 %v37
    %v107 = vunpack.c.l.b16 %v38
    %v108 = vunpack.c.l.b16 %v39
    %v109 = vunpack.c.l.b16 %v40
    %v110 = vunpack.c.l.b16 %v41
    %v111 = vunpack.c.l.b16 %v42
    %v112 = vunpack.c.l.b16 %v43
    %v113 = vunpack.c.l.b16 %v44
    %v114 = vunpack.c.l.b16 %v45
    %v115 = vunpack.c.l.b16 %v46
    %v116 = vunpack.c.l.b16 %v47
    %v117 = vunpack.c.l.b16 %v48
    %v118 = vunpack.c.l.b16 %v49
    %v119 = vunpack.c.l.b16 %v50
    %v120 = vunpack.c.l.b16 %v51
    %v121 = vunpack.c.l.b16 %v52
    %v122 = vunpack.c.l.b16 %v53
    %v123 = vunpack.c.l.b16 %v54
    %v124 = vunpack.c.l.b16 %v55
    %v125 = vunpack.c.l.b16 %v56
    %v126 = vunpack.c.l.b16 %v57
    %v127 = vunpack.c.l.b16 %v58
    %v128 = vunpack.c.l.b16 %v59
    %v129 = vunpack.c.l.b16 %v60
    %v130 = vunpack.c.l.b16 %v61
    %v131 = vunpack.c.l.b16 %v62
    %v132 = vunpack.c.l.b16 %v63
    %v133 = vunpack.c.l.b16 %v64
    %v134 = vunpack.c.l.b16 %v65
    %v135 = vunpack.c.l.b16 %v66
    %v136 = vunpack.c.l.b16 %v67
    %v137 = vpack.c.b16 %v106, %v105
    %v138 = vpack.c.b16 %v108, %v107
    %v139 = vpack.c.b16 %v110, %v109
    %v140 = vpack.c.b16 %v112, %v111
    %v141 = vpack.c.b16 %v114, %v113
    %v142 = vpack.c.b16 %v116, %v115
    %v143 = vpack.c.b16 %v118, %v117
    %v144 = vpack.c.b16 %v120, %v119
    %v145 = vpack.c.b16 %v122, %v121
    %v146 = vpack.c.b16 %v124, %v123
    %v147 = vpack.c.b16 %v126, %v125
    %v148 = vpack.c.b16 %v128, %v127
    %v149 = vpack.c.b16 %v130, %v129
    %v150 = vpack.c.b16 %v132, %v131
    %v151 = vpack.c.b16 %v134, %v133
    %v152 = vpack.c.b16 %v136, %v135
    %vm153 = vcmask 56320
    %v155 = vsel %vm153, %v137, 0
    %v158 = vsel %vm153, %v138, 0
    %v161 = vsel %vm153, %v139, 0
    %v164 = vsel %vm153, %v140, 0
    %v167 = vsel %vm153, %v141, 0
    %v170 = vsel %vm153, %v142, 0
    %v173 = vsel %vm153, %v143, 0
    %v176 = vsel %vm153, %v144, 0
    %v179 = vsel %vm153, %v145, 0
    %v182 = vsel %vm153, %v146, 0
    %v185 = vsel %vm153, %v147, 0
    %v188 = vsel %vm153, %v148, 0
    %v191 = vsel %vm153, %v149, 0
    %v194 = vsel %vm153, %v150, 0
    %v197 = vsel %vm153, %v151, 0
    %v200 = vsel %vm153, %v152, 0
    %vm202 = vcmask 1042432
    %vm203 = vcmask 1043456
    %v204 = vsel %vm202, 4294967295, 65535
    %v205 = vsel %vm203, %v204, 0
    %v207 = vand.u32 %v68, %v205
    %209 = vmatpush.bf16.msra.mxu0 0
    %210 = vmatpush.bf16.msra.mxu0 0
    %211 = vmatpush.bf16.msra.mxu0 0
    %212 = vmatpush.bf16.msra.mxu0 0
    %213 = vmatpush.bf16.msra.mxu0 0
    %214 = vmatpush.bf16.msra.mxu0 0
    %215 = vmatpush.bf16.msra.mxu0 0
    %216 = vmatpush.bf16.msra.mxu0 %v207
    %217 = vmatmul.bf16.gmra.mxu0 %v155
    %v218 = vpop.f32.mrf.mxu0
    %v219 = vadd.f32 %v71, %v218
    %v220 = vpop.f32.mrf.mxu0
    %v221 = vadd.f32 %v71, %v220
    %222 = vmatmul.bf16.gmra.mxu0 %v158
    %v223 = vpop.f32.mrf.mxu0
    %v224 = vadd.f32 %v71, %v223
    %v225 = vpop.f32.mrf.mxu0
    %v226 = vadd.f32 %v71, %v225
    %227 = vmatmul.bf16.gmra.mxu0 %v161
    %v228 = vpop.f32.mrf.mxu0
    %v229 = vadd.f32 %v71, %v228
    %v230 = vpop.f32.mrf.mxu0
    %v231 = vadd.f32 %v71, %v230
    %232 = vmatmul.bf16.gmra.mxu0 %v164
    %v233 = vpop.f32.mrf.mxu0
    %v234 = vadd.f32 %v71, %v233
    %v235 = vpop.f32.mrf.mxu0
    %v236 = vadd.f32 %v71, %v235
    %237 = vmatmul.bf16.gmra.mxu0 %v167
    %v238 = vpop.f32.mrf.mxu0
    %v239 = vadd.f32 %v71, %v238
    %v240 = vpop.f32.mrf.mxu0
    %v241 = vadd.f32 %v71, %v240
    %242 = vmatmul.bf16.gmra.mxu0 %v170
    %v243 = vpop.f32.mrf.mxu0
    %v244 = vadd.f32 %v71, %v243
    %v245 = vpop.f32.mrf.mxu0
    %v246 = vadd.f32 %v71, %v245
    %247 = vmatmul.bf16.gmra.mxu0 %v173
    %v248 = vpop.f32.mrf.mxu0
    %v249 = vadd.f32 %v71, %v248
    %v250 = vpop.f32.mrf.mxu0
    %v251 = vadd.f32 %v71, %v250
    %252 = vmatmul.bf16.gmra.mxu0 %v176
    %v253 = vpop.f32.mrf.mxu0
    %v254 = vadd.f32 %v71, %v253
    %v255 = vpop.f32.mrf.mxu0
    %v256 = vadd.f32 %v71, %v255
    %257 = vmatmul.bf16.gmra.mxu0 %v179
    %v258 = vpop.f32.mrf.mxu0
    %v259 = vadd.f32 %v71, %v258
    %v260 = vpop.f32.mrf.mxu0
    %v261 = vadd.f32 %v71, %v260
    %262 = vmatmul.bf16.gmra.mxu0 %v182
    %v263 = vpop.f32.mrf.mxu0
    %v264 = vadd.f32 %v71, %v263
    %v265 = vpop.f32.mrf.mxu0
    %v266 = vadd.f32 %v71, %v265
    %267 = vmatmul.bf16.gmra.mxu0 %v185
    %v268 = vpop.f32.mrf.mxu0
    %v269 = vadd.f32 %v71, %v268
    %v270 = vpop.f32.mrf.mxu0
    %v271 = vadd.f32 %v71, %v270
    %272 = vmatmul.bf16.gmra.mxu0 %v188
    %v273 = vpop.f32.mrf.mxu0
    %v274 = vadd.f32 %v71, %v273
    %v275 = vpop.f32.mrf.mxu0
    %v276 = vadd.f32 %v71, %v275
    %277 = vmatmul.bf16.gmra.mxu0 %v191
    %v278 = vpop.f32.mrf.mxu0
    %v279 = vadd.f32 %v71, %v278
    %v280 = vpop.f32.mrf.mxu0
    %v281 = vadd.f32 %v71, %v280
    %282 = vmatmul.bf16.gmra.mxu0 %v194
    %v283 = vpop.f32.mrf.mxu0
    %v284 = vadd.f32 %v71, %v283
    %v285 = vpop.f32.mrf.mxu0
    %v286 = vadd.f32 %v71, %v285
    %287 = vmatmul.bf16.gmra.mxu0 %v197
    %v288 = vpop.f32.mrf.mxu0
    %v289 = vadd.f32 %v71, %v288
    %v290 = vpop.f32.mrf.mxu0
    %v291 = vadd.f32 %v71, %v290
    %292 = vmatmul.bf16.gmra.mxu0 %v200
    %v293 = vpop.f32.mrf.mxu0
    %v294 = vadd.f32 %v71, %v293
    %v295 = vpop.f32.mrf.mxu0
    %v296 = vadd.f32 %v71, %v295
    %297 = vdwg.mxu0
    %v298 = vmax.f32 %v219, 0.0
    %v299 = vmax.f32 %v221, 0.0
    %v300 = vmax.f32 %v224, 0.0
    %v301 = vmax.f32 %v226, 0.0
    %v302 = vmax.f32 %v229, 0.0
    %v303 = vmax.f32 %v231, 0.0
    %v304 = vmax.f32 %v234, 0.0
    %v305 = vmax.f32 %v236, 0.0
    %v306 = vmax.f32 %v239, 0.0
    %v307 = vmax.f32 %v241, 0.0
    %v308 = vmax.f32 %v244, 0.0
    %v309 = vmax.f32 %v246, 0.0
    %v310 = vmax.f32 %v249, 0.0
    %v311 = vmax.f32 %v251, 0.0
    %v312 = vmax.f32 %v254, 0.0
    %v313 = vmax.f32 %v256, 0.0
    %v314 = vmax.f32 %v259, 0.0
    %v315 = vmax.f32 %v261, 0.0
    %v316 = vmax.f32 %v264, 0.0
    %v317 = vmax.f32 %v266, 0.0
    %v318 = vmax.f32 %v269, 0.0
    %v319 = vmax.f32 %v271, 0.0
    %v320 = vmax.f32 %v274, 0.0
    %v321 = vmax.f32 %v276, 0.0
    %v322 = vmax.f32 %v279, 0.0
    %v323 = vmax.f32 %v281, 0.0
    %v324 = vmax.f32 %v284, 0.0
    %v325 = vmax.f32 %v286, 0.0
    %v326 = vmax.f32 %v289, 0.0
    %v327 = vmax.f32 %v291, 0.0
    %v328 = vmax.f32 %v294, 0.0
    %v329 = vmax.f32 %v296, 0.0
    %v330 = vpack.c.bf16 %v299, %v298
    %v331 = vpack.c.bf16 %v301, %v300
    %v332 = vpack.c.bf16 %v303, %v302
    %v333 = vpack.c.bf16 %v305, %v304
    %v334 = vpack.c.bf16 %v307, %v306
    %v335 = vpack.c.bf16 %v309, %v308
    %v336 = vpack.c.bf16 %v311, %v310
    %v337 = vpack.c.bf16 %v313, %v312
    %v338 = vpack.c.bf16 %v315, %v314
    %v339 = vpack.c.bf16 %v317, %v316
    %v340 = vpack.c.bf16 %v319, %v318
    %v341 = vpack.c.bf16 %v321, %v320
    %v342 = vpack.c.bf16 %v323, %v322
    %v343 = vpack.c.bf16 %v325, %v324
    %v344 = vpack.c.bf16 %v327, %v326
    %v345 = vpack.c.bf16 %v329, %v328
    %v346 = vld [vmem:[%s3] sm:$0xf]
    %v347 = vld [vmem:[%s3 + $0x4] sm:$0xf]
    %v348 = vld [vmem:[%s3 + $0x8] sm:$0xf]
    %v349 = vld [vmem:[%s3 + $0xc] sm:$0xf]
    %v350 = vld [vmem:[%s4] sm:$0x1]
    %v352 = vperm.slane %v350, 0
    %v358 = vunpack.c.l.b16 %v346
    %v359 = vunpack.c.l.b16 %v347
    %v360 = vunpack.c.l.b16 %v348
    %v361 = vunpack.c.l.b16 %v349
    %v362 = vpack.c.b16 %v359, %v358
    %v363 = vpack.c.b16 %v361, %v360
    %vm366 = vcmask 261120
    %v368 = vsel %vm366, %v330, 0
    %v371 = vsel %vm366, %v331, 0
    %v374 = vsel %vm366, %v332, 0
    %v377 = vsel %vm366, %v333, 0
    %v380 = vsel %vm366, %v334, 0
    %v383 = vsel %vm366, %v335, 0
    %v386 = vsel %vm366, %v336, 0
    %v389 = vsel %vm366, %v337, 0
    %v392 = vsel %vm366, %v338, 0
    %v395 = vsel %vm366, %v339, 0
    %v398 = vsel %vm366, %v340, 0
    %v401 = vsel %vm366, %v341, 0
    %v404 = vsel %vm366, %v342, 0
    %v407 = vsel %vm366, %v343, 0
    %v410 = vsel %vm366, %v344, 0
    %v413 = vsel %vm366, %v345, 0
    %415 = vmatpush.bf16.msra.mxu0 0
    %416 = vmatpush.bf16.msra.mxu0 0
    %417 = vmatpush.bf16.msra.mxu0 0
    %418 = vmatpush.bf16.msra.mxu0 0
    %419 = vmatpush.bf16.msra.mxu0 0
    %420 = vmatpush.bf16.msra.mxu0 0
    %421 = vmatpush.bf16.msra.mxu0 %v363
    %422 = vmatpush.bf16.msra.mxu0 %v362
    %423 = vmatmul.bf16.gmra.mxu0 %v368
    %v424 = vpop.f32.mrf.mxu0
    %v425 = vadd.f32 %v352, %v424
    %v426 = vpop.f32.mrf.mxu0
    %v427 = vadd.f32 %v352, %v426
    %428 = vmatmul.bf16.gmra.mxu0 %v371
    %v429 = vpop.f32.mrf.mxu0
    %v430 = vadd.f32 %v352, %v429
    %v431 = vpop.f32.mrf.mxu0
    %v432 = vadd.f32 %v352, %v431
    %433 = vmatmul.bf16.gmra.mxu0 %v374
    %v434 = vpop.f32.mrf.mxu0
    %v435 = vadd.f32 %v352, %v434
    %v436 = vpop.f32.mrf.mxu0
    %v437 = vadd.f32 %v352, %v436
    %438 = vmatmul.bf16.gmra.mxu0 %v377
    %v439 = vpop.f32.mrf.mxu0
    %v440 = vadd.f32 %v352, %v439
    %v441 = vpop.f32.mrf.mxu0
    %v442 = vadd.f32 %v352, %v441
    %443 = vmatmul.bf16.gmra.mxu0 %v380
    %v444 = vpop.f32.mrf.mxu0
    %v445 = vadd.f32 %v352, %v444
    %v446 = vpop.f32.mrf.mxu0
    %v447 = vadd.f32 %v352, %v446
    %448 = vmatmul.bf16.gmra.mxu0 %v383
    %v449 = vpop.f32.mrf.mxu0
    %v450 = vadd.f32 %v352, %v449
    %v451 = vpop.f32.mrf.mxu0
    %v452 = vadd.f32 %v352, %v451
    %453 = vmatmul.bf16.gmra.mxu0 %v386
    %v454 = vpop.f32.mrf.mxu0
    %v455 = vadd.f32 %v352, %v454
    %v456 = vpop.f32.mrf.mxu0
    %v457 = vadd.f32 %v352, %v456
    %458 = vmatmul.bf16.gmra.mxu0 %v389
    %v459 = vpop.f32.mrf.mxu0
    %v460 = vadd.f32 %v352, %v459
    %v461 = vpop.f32.mrf.mxu0
    %v462 = vadd.f32 %v352, %v461
    %463 = vmatmul.bf16.gmra.mxu0 %v392
    %v464 = vpop.f32.mrf.mxu0
    %v465 = vadd.f32 %v352, %v464
    %v466 = vpop.f32.mrf.mxu0
    %v467 = vadd.f32 %v352, %v466
    %468 = vmatmul.bf16.gmra.mxu0 %v395
    %v469 = vpop.f32.mrf.mxu0
    %v470 = vadd.f32 %v352, %v469
    %v471 = vpop.f32.mrf.mxu0
    %v472 = vadd.f32 %v352, %v471
    %473 = vmatmul.bf16.gmra.mxu0 %v398
    %v474 = vpop.f32.mrf.mxu0
    %v475 = vadd.f32 %v352, %v474
    %v476 = vpop.f32.mrf.mxu0
    %v477 = vadd.f32 %v352, %v476
    %478 = vmatmul.bf16.gmra.mxu0 %v401
    %v479 = vpop.f32.mrf.mxu0
    %v480 = vadd.f32 %v352, %v479
    %v481 = vpop.f32.mrf.mxu0
    %v482 = vadd.f32 %v352, %v481
    %483 = vmatmul.bf16.gmra.mxu0 %v404
    %v484 = vpop.f32.mrf.mxu0
    %v485 = vadd.f32 %v352, %v484
    %v486 = vpop.f32.mrf.mxu0
    %v487 = vadd.f32 %v352, %v486
    %488 = vmatmul.bf16.gmra.mxu0 %v407
    %v489 = vpop.f32.mrf.mxu0
    %v490 = vadd.f32 %v352, %v489
    %v491 = vpop.f32.mrf.mxu0
    %v492 = vadd.f32 %v352, %v491
    %493 = vmatmul.bf16.gmra.mxu0 %v410
    %v494 = vpop.f32.mrf.mxu0
    %v495 = vadd.f32 %v352, %v494
    %v496 = vpop.f32.mrf.mxu0
    %v497 = vadd.f32 %v352, %v496
    %498 = vmatmul.bf16.gmra.mxu0 %v413
    %v499 = vpop.f32.mrf.mxu0
    %v500 = vadd.f32 %v352, %v499
    %v501 = vpop.f32.mrf.mxu0
    %v502 = vadd.f32 %v352, %v501
    %503 = vdwg.mxu0
    %v504 = vmax.f32 %v425, 0.0
    %v505 = vmax.f32 %v427, 0.0
    %v506 = vmax.f32 %v430, 0.0
    %v507 = vmax.f32 %v432, 0.0
    %v508 = vmax.f32 %v435, 0.0
    %v509 = vmax.f32 %v437, 0.0
    %v510 = vmax.f32 %v440, 0.0
    %v511 = vmax.f32 %v442, 0.0
    %v512 = vmax.f32 %v445, 0.0
    %v513 = vmax.f32 %v447, 0.0
    %v514 = vmax.f32 %v450, 0.0
    %v515 = vmax.f32 %v452, 0.0
    %v516 = vmax.f32 %v455, 0.0
    %v517 = vmax.f32 %v457, 0.0
    %v518 = vmax.f32 %v460, 0.0
    %v519 = vmax.f32 %v462, 0.0
    %v520 = vmax.f32 %v465, 0.0
    %v521 = vmax.f32 %v467, 0.0
    %v522 = vmax.f32 %v470, 0.0
    %v523 = vmax.f32 %v472, 0.0
    %v524 = vmax.f32 %v475, 0.0
    %v525 = vmax.f32 %v477, 0.0
    %v526 = vmax.f32 %v480, 0.0
    %v527 = vmax.f32 %v482, 0.0
    %v528 = vmax.f32 %v485, 0.0
    %v529 = vmax.f32 %v487, 0.0
    %v530 = vmax.f32 %v490, 0.0
    %v531 = vmax.f32 %v492, 0.0
    %v532 = vmax.f32 %v495, 0.0
    %v533 = vmax.f32 %v497, 0.0
    %v534 = vmax.f32 %v500, 0.0
    %v535 = vmax.f32 %v502, 0.0
    %v536 = vpack.c.bf16 %v505, %v504
    %v537 = vpack.c.bf16 %v507, %v506
    %v538 = vpack.c.bf16 %v509, %v508
    %v539 = vpack.c.bf16 %v511, %v510
    %v540 = vpack.c.bf16 %v513, %v512
    %v541 = vpack.c.bf16 %v515, %v514
    %v542 = vpack.c.bf16 %v517, %v516
    %v543 = vpack.c.bf16 %v519, %v518
    %v544 = vpack.c.bf16 %v521, %v520
    %v545 = vpack.c.bf16 %v523, %v522
    %v546 = vpack.c.bf16 %v525, %v524
    %v547 = vpack.c.bf16 %v527, %v526
    %v548 = vpack.c.bf16 %v529, %v528
    %v549 = vpack.c.bf16 %v531, %v530
    %v550 = vpack.c.bf16 %v533, %v532
    %v551 = vpack.c.bf16 %v535, %v534
    %v552 = vld [vmem:[%s5] sm:$0xf]
    %v553 = vld [vmem:[%s5 + $0x4] sm:$0xf]
    %v554 = vld [vmem:[%s5 + $0x8] sm:$0xf]
    %v555 = vld [vmem:[%s5 + $0xc] sm:$0xf]
    %v556 = vld [vmem:[%s6] sm:$0x1]
    %v558 = vperm.slane %v556, 0
    %v564 = vunpack.c.l.b16 %v552
    %v565 = vunpack.c.l.b16 %v553
    %v566 = vunpack.c.l.b16 %v554
    %v567 = vunpack.c.l.b16 %v555
    %v568 = vpack.c.b16 %v565, %v564
    %v569 = vpack.c.b16 %v567, %v566
    %v573 = vsel %vm366, %v536, 0
    %v576 = vsel %vm366, %v537, 0
    %v579 = vsel %vm366, %v538, 0
    %v582 = vsel %vm366, %v539, 0
    %v585 = vsel %vm366, %v540, 0
    %v588 = vsel %vm366, %v541, 0
    %v591 = vsel %vm366, %v542, 0
    %v594 = vsel %vm366, %v543, 0
    %v597 = vsel %vm366, %v544, 0
    %v600 = vsel %vm366, %v545, 0
    %v603 = vsel %vm366, %v546, 0
    %v606 = vsel %vm366, %v547, 0
    %v609 = vsel %vm366, %v548, 0
    %v612 = vsel %vm366, %v549, 0
    %v615 = vsel %vm366, %v550, 0
    %v618 = vsel %vm366, %v551, 0
    %620 = vmatpush.bf16.msra.mxu0 0
    %621 = vmatpush.bf16.msra.mxu0 0
    %622 = vmatpush.bf16.msra.mxu0 0
    %623 = vmatpush.bf16.msra.mxu0 0
    %624 = vmatpush.bf16.msra.mxu0 0
    %625 = vmatpush.bf16.msra.mxu0 0
    %626 = vmatpush.bf16.msra.mxu0 %v569
    %627 = vmatpush.bf16.msra.mxu0 %v568
    %628 = vmatmul.bf16.gmra.mxu0 %v573
    %v629 = vpop.f32.mrf.mxu0
    %v630 = vadd.f32 %v558, %v629
    %v631 = vpop.f32.mrf.mxu0
    %v632 = vadd.f32 %v558, %v631
    %633 = vmatmul.bf16.gmra.mxu0 %v576
    %v634 = vpop.f32.mrf.mxu0
    %v635 = vadd.f32 %v558, %v634
    %v636 = vpop.f32.mrf.mxu0
    %v637 = vadd.f32 %v558, %v636
    %638 = vmatmul.bf16.gmra.mxu0 %v579
    %v639 = vpop.f32.mrf.mxu0
    %v640 = vadd.f32 %v558, %v639
    %v641 = vpop.f32.mrf.mxu0
    %v642 = vadd.f32 %v558, %v641
    %643 = vmatmul.bf16.gmra.mxu0 %v582
    %v644 = vpop.f32.mrf.mxu0
    %v645 = vadd.f32 %v558, %v644
    %v646 = vpop.f32.mrf.mxu0
    %v647 = vadd.f32 %v558, %v646
    %648 = vmatmul.bf16.gmra.mxu0 %v585
    %v649 = vpop.f32.mrf.mxu0
    %v650 = vadd.f32 %v558, %v649
    %v651 = vpop.f32.mrf.mxu0
    %v652 = vadd.f32 %v558, %v651
    %653 = vmatmul.bf16.gmra.mxu0 %v588
    %v654 = vpop.f32.mrf.mxu0
    %v655 = vadd.f32 %v558, %v654
    %v656 = vpop.f32.mrf.mxu0
    %v657 = vadd.f32 %v558, %v656
    %658 = vmatmul.bf16.gmra.mxu0 %v591
    %v659 = vpop.f32.mrf.mxu0
    %v660 = vadd.f32 %v558, %v659
    %v661 = vpop.f32.mrf.mxu0
    %v662 = vadd.f32 %v558, %v661
    %663 = vmatmul.bf16.gmra.mxu0 %v594
    %v664 = vpop.f32.mrf.mxu0
    %v665 = vadd.f32 %v558, %v664
    %v666 = vpop.f32.mrf.mxu0
    %v667 = vadd.f32 %v558, %v666
    %668 = vmatmul.bf16.gmra.mxu0 %v597
    %v669 = vpop.f32.mrf.mxu0
    %v670 = vadd.f32 %v558, %v669
    %v671 = vpop.f32.mrf.mxu0
    %v672 = vadd.f32 %v558, %v671
    %673 = vmatmul.bf16.gmra.mxu0 %v600
    %v674 = vpop.f32.mrf.mxu0
    %v675 = vadd.f32 %v558, %v674
    %v676 = vpop.f32.mrf.mxu0
    %v677 = vadd.f32 %v558, %v676
    %678 = vmatmul.bf16.gmra.mxu0 %v603
    %v679 = vpop.f32.mrf.mxu0
    %v680 = vadd.f32 %v558, %v679
    %v681 = vpop.f32.mrf.mxu0
    %v682 = vadd.f32 %v558, %v681
    %683 = vmatmul.bf16.gmra.mxu0 %v606
    %v684 = vpop.f32.mrf.mxu0
    %v685 = vadd.f32 %v558, %v684
    %v686 = vpop.f32.mrf.mxu0
    %v687 = vadd.f32 %v558, %v686
    %688 = vmatmul.bf16.gmra.mxu0 %v609
    %v689 = vpop.f32.mrf.mxu0
    %v690 = vadd.f32 %v558, %v689
    %v691 = vpop.f32.mrf.mxu0
    %v692 = vadd.f32 %v558, %v691
    %693 = vmatmul.bf16.gmra.mxu0 %v612
    %v694 = vpop.f32.mrf.mxu0
    %v695 = vadd.f32 %v558, %v694
    %v696 = vpop.f32.mrf.mxu0
    %v697 = vadd.f32 %v558, %v696
    %698 = vmatmul.bf16.gmra.mxu0 %v615
    %v699 = vpop.f32.mrf.mxu0
    %v700 = vadd.f32 %v558, %v699
    %v701 = vpop.f32.mrf.mxu0
    %v702 = vadd.f32 %v558, %v701
    %703 = vmatmul.bf16.gmra.mxu0 %v618
    %v704 = vpop.f32.mrf.mxu0
    %v705 = vadd.f32 %v558, %v704
    %v706 = vpop.f32.mrf.mxu0
    %v707 = vadd.f32 %v558, %v706
    %708 = vdwg.mxu0
    %v709 = vmax.f32 %v630, 0.0
    %v710 = vmax.f32 %v632, 0.0
    %v711 = vmax.f32 %v635, 0.0
    %v712 = vmax.f32 %v637, 0.0
    %v713 = vmax.f32 %v640, 0.0
    %v714 = vmax.f32 %v642, 0.0
    %v715 = vmax.f32 %v645, 0.0
    %v716 = vmax.f32 %v647, 0.0
    %v717 = vmax.f32 %v650, 0.0
    %v718 = vmax.f32 %v652, 0.0
    %v719 = vmax.f32 %v655, 0.0
    %v720 = vmax.f32 %v657, 0.0
    %v721 = vmax.f32 %v660, 0.0
    %v722 = vmax.f32 %v662, 0.0
    %v723 = vmax.f32 %v665, 0.0
    %v724 = vmax.f32 %v667, 0.0
    %v725 = vmax.f32 %v670, 0.0
    %v726 = vmax.f32 %v672, 0.0
    %v727 = vmax.f32 %v675, 0.0
    %v728 = vmax.f32 %v677, 0.0
    %v729 = vmax.f32 %v680, 0.0
    %v730 = vmax.f32 %v682, 0.0
    %v731 = vmax.f32 %v685, 0.0
    %v732 = vmax.f32 %v687, 0.0
    %v733 = vmax.f32 %v690, 0.0
    %v734 = vmax.f32 %v692, 0.0
    %v735 = vmax.f32 %v695, 0.0
    %v736 = vmax.f32 %v697, 0.0
    %v737 = vmax.f32 %v700, 0.0
    %v738 = vmax.f32 %v702, 0.0
    %v739 = vmax.f32 %v705, 0.0
    %v740 = vmax.f32 %v707, 0.0
    %v741 = vrot.slane %v709, 4
    %v742 = vmax.f32 %v709, %v741
    %v743 = vrot.slane %v742, 2
    %v744 = vmax.f32 %v742, %v743
    %v745 = vrot.slane %v744, 1
    %v746 = vmax.f32 %v744, %v745
    %v747 = vrot.slane %v710, 4
    %v748 = vmax.f32 %v710, %v747
    %v749 = vrot.slane %v748, 2
    %v750 = vmax.f32 %v748, %v749
    %v751 = vrot.slane %v750, 1
    %v752 = vmax.f32 %v750, %v751
    %v753 = vrot.slane %v711, 4
    %v754 = vmax.f32 %v711, %v753
    %v755 = vrot.slane %v754, 2
    %v756 = vmax.f32 %v754, %v755
    %v757 = vrot.slane %v756, 1
    %v758 = vmax.f32 %v756, %v757
    %v759 = vrot.slane %v712, 4
    %v760 = vmax.f32 %v712, %v759
    %v761 = vrot.slane %v760, 2
    %v762 = vmax.f32 %v760, %v761
    %v763 = vrot.slane %v762, 1
    %v764 = vmax.f32 %v762, %v763
    %v765 = vrot.slane %v713, 4
    %v766 = vmax.f32 %v713, %v765
    %v767 = vrot.slane %v766, 2
    %v768 = vmax.f32 %v766, %v767
    %v769 = vrot.slane %v768, 1
    %v770 = vmax.f32 %v768, %v769
    %v771 = vrot.slane %v714, 4
    %v772 = vmax.f32 %v714, %v771
    %v773 = vrot.slane %v772, 2
    %v774 = vmax.f32 %v772, %v773
    %v775 = vrot.slane %v774, 1
    %v776 = vmax.f32 %v774, %v775
    %v777 = vrot.slane %v715, 4
    %v778 = vmax.f32 %v715, %v777
    %v779 = vrot.slane %v778, 2
    %v780 = vmax.f32 %v778, %v779
    %v781 = vrot.slane %v780, 1
    %v782 = vmax.f32 %v780, %v781
    %v783 = vrot.slane %v716, 4
    %v784 = vmax.f32 %v716, %v783
    %v785 = vrot.slane %v784, 2
    %v786 = vmax.f32 %v784, %v785
    %v787 = vrot.slane %v786, 1
    %v788 = vmax.f32 %v786, %v787
    %v789 = vrot.slane %v717, 4
    %v790 = vmax.f32 %v717, %v789
    %v791 = vrot.slane %v790, 2
    %v792 = vmax.f32 %v790, %v791
    %v793 = vrot.slane %v792, 1
    %v794 = vmax.f32 %v792, %v793
    %v795 = vrot.slane %v718, 4
    %v796 = vmax.f32 %v718, %v795
    %v797 = vrot.slane %v796, 2
    %v798 = vmax.f32 %v796, %v797
    %v799 = vrot.slane %v798, 1
    %v800 = vmax.f32 %v798, %v799
    %v801 = vrot.slane %v719, 4
    %v802 = vmax.f32 %v719, %v801
    %v803 = vrot.slane %v802, 2
    %v804 = vmax.f32 %v802, %v803
    %v805 = vrot.slane %v804, 1
    %v806 = vmax.f32 %v804, %v805
    %v807 = vrot.slane %v720, 4
    %v808 = vmax.f32 %v720, %v807
    %v809 = vrot.slane %v808, 2
    %v810 = vmax.f32 %v808, %v809
    %v811 = vrot.slane %v810, 1
    %v812 = vmax.f32 %v810, %v811
    %v813 = vrot.slane %v721, 4
    %v814 = vmax.f32 %v721, %v813
    %v815 = vrot.slane %v814, 2
    %v816 = vmax.f32 %v814, %v815
    %v817 = vrot.slane %v816, 1
    %v818 = vmax.f32 %v816, %v817
    %v819 = vrot.slane %v722, 4
    %v820 = vmax.f32 %v722, %v819
    %v821 = vrot.slane %v820, 2
    %v822 = vmax.f32 %v820, %v821
    %v823 = vrot.slane %v822, 1
    %v824 = vmax.f32 %v822, %v823
    %v825 = vrot.slane %v723, 4
    %v826 = vmax.f32 %v723, %v825
    %v827 = vrot.slane %v826, 2
    %v828 = vmax.f32 %v826, %v827
    %v829 = vrot.slane %v828, 1
    %v830 = vmax.f32 %v828, %v829
    %v831 = vrot.slane %v724, 4
    %v832 = vmax.f32 %v724, %v831
    %v833 = vrot.slane %v832, 2
    %v834 = vmax.f32 %v832, %v833
    %v835 = vrot.slane %v834, 1
    %v836 = vmax.f32 %v834, %v835
    %v837 = vrot.slane %v725, 4
    %v838 = vmax.f32 %v725, %v837
    %v839 = vrot.slane %v838, 2
    %v840 = vmax.f32 %v838, %v839
    %v841 = vrot.slane %v840, 1
    %v842 = vmax.f32 %v840, %v841
    %v843 = vrot.slane %v726, 4
    %v844 = vmax.f32 %v726, %v843
    %v845 = vrot.slane %v844, 2
    %v846 = vmax.f32 %v844, %v845
    %v847 = vrot.slane %v846, 1
    %v848 = vmax.f32 %v846, %v847
    %v849 = vrot.slane %v727, 4
    %v850 = vmax.f32 %v727, %v849
    %v851 = vrot.slane %v850, 2
    %v852 = vmax.f32 %v850, %v851
    %v853 = vrot.slane %v852, 1
    %v854 = vmax.f32 %v852, %v853
    %v855 = vrot.slane %v728, 4
    %v856 = vmax.f32 %v728, %v855
    %v857 = vrot.slane %v856, 2
    %v858 = vmax.f32 %v856, %v857
    %v859 = vrot.slane %v858, 1
    %v860 = vmax.f32 %v858, %v859
    %v861 = vrot.slane %v729, 4
    %v862 = vmax.f32 %v729, %v861
    %v863 = vrot.slane %v862, 2
    %v864 = vmax.f32 %v862, %v863
    %v865 = vrot.slane %v864, 1
    %v866 = vmax.f32 %v864, %v865
    %v867 = vrot.slane %v730, 4
    %v868 = vmax.f32 %v730, %v867
    %v869 = vrot.slane %v868, 2
    %v870 = vmax.f32 %v868, %v869
    %v871 = vrot.slane %v870, 1
    %v872 = vmax.f32 %v870, %v871
    %v873 = vrot.slane %v731, 4
    %v874 = vmax.f32 %v731, %v873
    %v875 = vrot.slane %v874, 2
    %v876 = vmax.f32 %v874, %v875
    %v877 = vrot.slane %v876, 1
    %v878 = vmax.f32 %v876, %v877
    %v879 = vrot.slane %v732, 4
    %v880 = vmax.f32 %v732, %v879
    %v881 = vrot.slane %v880, 2
    %v882 = vmax.f32 %v880, %v881
    %v883 = vrot.slane %v882, 1
    %v884 = vmax.f32 %v882, %v883
    %v885 = vrot.slane %v733, 4
    %v886 = vmax.f32 %v733, %v885
    %v887 = vrot.slane %v886, 2
    %v888 = vmax.f32 %v886, %v887
    %v889 = vrot.slane %v888, 1
    %v890 = vmax.f32 %v888, %v889
    %v891 = vrot.slane %v734, 4
    %v892 = vmax.f32 %v734, %v891
    %v893 = vrot.slane %v892, 2
    %v894 = vmax.f32 %v892, %v893
    %v895 = vrot.slane %v894, 1
    %v896 = vmax.f32 %v894, %v895
    %v897 = vrot.slane %v735, 4
    %v898 = vmax.f32 %v735, %v897
    %v899 = vrot.slane %v898, 2
    %v900 = vmax.f32 %v898, %v899
    %v901 = vrot.slane %v900, 1
    %v902 = vmax.f32 %v900, %v901
    %v903 = vrot.slane %v736, 4
    %v904 = vmax.f32 %v736, %v903
    %v905 = vrot.slane %v904, 2
    %v906 = vmax.f32 %v904, %v905
    %v907 = vrot.slane %v906, 1
    %v908 = vmax.f32 %v906, %v907
    %v909 = vrot.slane %v737, 4
    %v910 = vmax.f32 %v737, %v909
    %v911 = vrot.slane %v910, 2
    %v912 = vmax.f32 %v910, %v911
    %v913 = vrot.slane %v912, 1
    %v914 = vmax.f32 %v912, %v913
    %v915 = vrot.slane %v738, 4
    %v916 = vmax.f32 %v738, %v915
    %v917 = vrot.slane %v916, 2
    %v918 = vmax.f32 %v916, %v917
    %v919 = vrot.slane %v918, 1
    %v920 = vmax.f32 %v918, %v919
    %v921 = vrot.slane %v739, 4
    %v922 = vmax.f32 %v739, %v921
    %v923 = vrot.slane %v922, 2
    %v924 = vmax.f32 %v922, %v923
    %v925 = vrot.slane %v924, 1
    %v926 = vmax.f32 %v924, %v925
    %v927 = vrot.slane %v740, 4
    %v928 = vmax.f32 %v740, %v927
    %v929 = vrot.slane %v928, 2
    %v930 = vmax.f32 %v928, %v929
    %v931 = vrot.slane %v930, 1
    %v932 = vmax.f32 %v930, %v931
    %v933 = vld [vmem:[#allocation2] sm:$0xff]
    %v934 = vld [vmem:[#allocation2 + $0x8] sm:$0xff]
    %v935 = vld [vmem:[#allocation2 + $0x10] sm:$0xff]
    %v936 = vld [vmem:[#allocation2 + $0x18] sm:$0xff]
    %vm969 = vcmask 1041409
    %v970 = vsel %vm969, %v752, %v746
    %vm971 = vcmask 1042434
    %v972 = vsel %vm971, %v758, %v970
    %vm973 = vcmask 1043459
    %v974 = vsel %vm973, %v764, %v972
    %vm975 = vcmask 1044484
    %v976 = vsel %vm975, %v770, %v974
    %vm977 = vcmask 1045509
    %v978 = vsel %vm977, %v776, %v976
    %vm979 = vcmask 1046534
    %v980 = vsel %vm979, %v782, %v978
    %vm981 = vcmask 1047559
    %v982 = vsel %vm981, %v788, %v980
    %v983 = vsel %vm969, %v800, %v794
    %v984 = vsel %vm971, %v806, %v983
    %v985 = vsel %vm973, %v812, %v984
    %v986 = vsel %vm975, %v818, %v985
    %v987 = vsel %vm977, %v824, %v986
    %v988 = vsel %vm979, %v830, %v987
    %v989 = vsel %vm981, %v836, %v988
    %v990 = vsel %vm969, %v848, %v842
    %v991 = vsel %vm971, %v854, %v990
    %v992 = vsel %vm973, %v860, %v991
    %v993 = vsel %vm975, %v866, %v992
    %v994 = vsel %vm977, %v872, %v993
    %v995 = vsel %vm979, %v878, %v994
    %v996 = vsel %vm981, %v884, %v995
    %v997 = vsel %vm969, %v896, %v890
    %v998 = vsel %vm971, %v902, %v997
    %v999 = vsel %vm973, %v908, %v998
    %v1000 = vsel %vm975, %v914, %v999
    %v1001 = vsel %vm977, %v920, %v1000
    %v1002 = vsel %vm979, %v926, %v1001
    %v1003 = vsel %vm981, %v932, %v1002
    %v1008 = vmax.f32 %v933, %v982
    %v1009 = vmax.f32 %v934, %v989
    %v1010 = vmax.f32 %v935, %v996
    %v1011 = vmax.f32 %v936, %v1003
    %1012 = vst [vmem:[#allocation2] sm:$0xff] %v1008
    %1013 = vst [vmem:[#allocation2 + $0x8] sm:$0xff] %v1009
    %1014 = vst [vmem:[#allocation2 + $0x10] sm:$0xff] %v1010
    %1015 = vst [vmem:[#allocation2 + $0x18] sm:$0xff] %v1011
    // Predicated region
    $region34: #{tpu_custom_call.1} parent=1 // pred_check
      %p1016 = pneg %p28
    $region35: #{tpu_custom_call.1} parent=1 // pred_check_branch
      %1018 = sbr.rel (%p1016) target = $region37
    $region36: #{tpu_custom_call.1} parent=1 // pred_region
      %v1019 = vld [vmem:[#allocation2] sm:$0xff]
      %v1020 = vld [vmem:[#allocation2 + $0x8] sm:$0xff]
      %v1021 = vld [vmem:[#allocation2 + $0x10] sm:$0xff]
      %v1022 = vld [vmem:[#allocation2 + $0x18] sm:$0xff]
      %1023 = vst [vmem:[#allocation3] sm:$0xff] %v1019
      %1024 = vst [vmem:[#allocation3 + $0x8] sm:$0xff] %v1020
      %1025 = vst [vmem:[#allocation3 + $0x10] sm:$0xff] %v1021
      %1026 = vst [vmem:[#allocation3 + $0x18] sm:$0xff] %v1022
    $region37: #{tpu_custom_call.1} parent=1 // pred_fallthru
      _
    // Predicated region
    $region38: #{tpu_custom_call.1} parent=1 // pred_check
      _
    $region39: #{tpu_custom_call.1} parent=1 // pred_check_branch
      %1028 = sbr.rel (0) target = $region41
    $region40: #{tpu_custom_call.1} parent=1 // pred_region
      %1030 = vsyncadd [#allocation4], 0
      %s1031 = sshll.u32 [#allocation3], 4
      %s1032 = int_to_ptr.vmem [resolvable:$true] %s1031
      %s1033 = sshll.u32 %s7, 4
      %s1034 = int_to_ptr.hbm [resolvable:$true] %s1033
      %1039 = dma.vmem_to_hbm [thread:$0]  %s1032, 512, %s1034, [#allocation4], 128, 128, 8
    $region41: #{tpu_custom_call.1} parent=1 // pred_fallthru
      _
    // Predicated region
    $region42: #{tpu_custom_call.1} parent=1 // pred_check
      _
    $region43: #{tpu_custom_call.1} parent=1 // pred_check_branch
      %1041 = sbr.rel (0) target = $region45
    $region44: #{tpu_custom_call.1} parent=1 // pred_region
      %1043 = dma.done [#allocation4], 512
    $region45: #{tpu_custom_call.1} parent=1 // pred_fallthru
      _
    %1044 = vsyncpa [#allocation4], 1

</llo_original>
